<compile_context>
chip_gen: v7x
topology: tpu7x:2x2x1
jax: 0.10.0
libtpu: 0.0.40
codegen_flags: <defaults>
</compile_context>

<pallas_src>
import functools

import jax
import jax.numpy as jnp
from jax import lax
from jax.experimental import pallas as pl
from jax.experimental.pallas import tpu as pltpu


def _block_kernel(H, W, x_ref, w1_ref, w2_ref, b1_ref, b2_ref, idx_ref,
                  o_ref, imc_ref):
    """Fused BasicBlockEnc for one batch element, NCHW-flat (C, H*W) layout.

    x_ref   : (1, C, HW)  input tile, f32 (also the identity shortcut)
    w1_ref  : (C, 9*C)    conv1 weights (K ordered dy,dx,cin), BN1 scale folded, bf16
    w2_ref  : (C, 9*C)    conv2 weights, BN2 scale folded, bf16
    b1_ref  : (C, 1)      folded BN1 shift, f32
    b2_ref  : (C, 1)      folded BN2 shift, f32
    idx_ref : (2, HW)     int32 [row_index; col_index] of every flattened pixel
    o_ref   : (1, C, HW)  output tile, f32 (lane-dense store)
    imc_ref : (9*C, HW)   bf16 VMEM im2col staging buffer: K on sublanes,
                          spatial on lanes -> lane-dense stores/loads.
    """
    _, C, HW = o_ref.shape

    def fill_imc(base):
        # base: (C, HW) f32 feature map. For each 3x3 tap (dy, dx) place the
        # spatially shifted map into rows [t*C, (t+1)*C) of the scratch,
        # t = dy*3 + dx.  A shift by (dy-1, dx-1) pixels is a single static
        # lane roll of the flattened map (XLU); positions that fall outside
        # the image are zeroed with a select.  Rolls/selects stay in f32
        # (v5e-friendly); the only cast is at the bf16 scratch store.
        row = jnp.broadcast_to(idx_ref[0:1, :], (C, HW))
        col = jnp.broadcast_to(idx_ref[1:2, :], (C, HW))
        keep_y = {0: row >= 1, 2: row < H - 1}   # dy=0 needs h-1>=0, dy=2 needs h+1<H
        keep_x = {0: col >= 1, 2: col < W - 1}   # dx=0 needs w-1>=0, dx=2 needs w+1<W

        # Center tap (dy=dx=1): the base itself (conv1's epilogue lands here).
        imc_ref[4 * C:5 * C, :] = base.astype(jnp.bfloat16)

        for dy in range(3):
            for dx in range(3):
                if dy == 1 and dx == 1:
                    continue
                # slab[l] = base[l + (dy-1)*W + (dx-1)]  == np.roll by -offset.
                shift = (-((dy - 1) * W + (dx - 1))) % HW
                slab = pltpu.roll(base, shift=shift, axis=1)
                if dy != 1:
                    slab = jnp.where(keep_y[dy], slab, 0.0)
                if dx != 1:
                    slab = jnp.where(keep_x[dx], slab, 0.0)
                t = dy * 3 + dx
                imc_ref[t * C:(t + 1) * C, :] = slab.astype(jnp.bfloat16)

    def conv_mxu(w_ref):
        # Single MXU matmul per conv: (C, 9C) @ (9C, HW) -> (C, HW), f32 acc.
        return jnp.dot(w_ref[...], imc_ref[...],
                       preferred_element_type=jnp.float32)

    # ---- conv1 -> bn1 (scale folded into w1, shift b1) -> relu
    fill_imc(x_ref[0])
    out1 = jnp.maximum(conv_mxu(w1_ref) + b1_ref[...], 0.0)      # (C, HW) f32

    # ---- conv2 -> bn2 -> identity shortcut (stride == 1) -> relu
    fill_imc(out1)                                                # out1 -> center slab
    out2 = conv_mxu(w2_ref) + b2_ref[...] + x_ref[0]              # re-read x here
    o_ref[0] = jnp.maximum(out2, 0.0)


@functools.partial(jax.jit, static_argnames=("eps",))
def basic_block_enc(x_nchw, w1_oihw, g1, be1, m1, v1,
                    w2_oihw, g2, be2, m2, v2, eps=1e-5):
    """Forward pass of BasicBlockEnc (stride=1). Input/output are NCHW f32."""
    N, Cin, H, W = x_nchw.shape
    Cout = w1_oihw.shape[0]
    assert Cin == Cout, "stride=1 block: planes == in_planes"
    HW = H * W
    # NOTE: HW % 128 == 0 (true for typical feature maps incl. this test) keeps
    # every store fully lane-dense; other sizes are still correct.

    # Free layout change: NCHW -> (N, C, H*W). No transposes at the boundary.
    x = x_nchw.reshape(N, Cin, HW).astype(jnp.float32)

    # Fold BN (inference form) into per-output-channel scale/shift; fold the
    # scale into the conv weights host-side, keep the shift as a bias.
    inv1 = g1 * lax.rsqrt(v1 + eps)
    inv2 = g2 * lax.rsqrt(v2 + eps)
    b1 = (be1 - m1 * inv1).reshape(Cout, 1).astype(jnp.float32)
    b2 = (be2 - m2 * inv2).reshape(Cout, 1).astype(jnp.float32)

    def prep_w(w_oihw, inv):
        # OIHW -> (O, dy, dx, I) -> (O, 9*I); K index = (dy*3+dx)*I + i to match
        # the im2col row order; BN scale folded per output row; bf16 for MXU.
        w = jnp.transpose(w_oihw, (0, 2, 3, 1)).astype(jnp.float32)
        w = w * inv[:, None, None, None]
        return w.reshape(Cout, 9 * w.shape[-1]).astype(jnp.bfloat16)

    w1 = prep_w(w1_oihw, inv1)
    w2 = prep_w(w2_oihw, inv2)

    # (row, col) index of every flattened pixel, used for border masking.
    hw = jnp.arange(HW, dtype=jnp.int32)
    idx = jnp.stack([hw // W, hw % W]).astype(jnp.int32)          # (2, HW)

    # Explicit VMEM budget: double-buffered in/out tiles + weights + bf16
    # scratch, +50% headroom; capped at v7x's 64 MiB physical VMEM.
    # TODO(synk): raise the cap toward 128 MiB when targeting only v5e/v6e.
    x_bytes = Cin * HW * 4
    o_bytes = Cout * HW * 4
    w_bytes = (Cout * 9 * Cin + Cout * 9 * Cout) * 2
    misc_bytes = 2 * HW * 4 + 2 * Cout * 4
    imc_bytes = 9 * Cout * HW * 2
    need = 2 * (x_bytes + o_bytes + w_bytes + misc_bytes) + imc_bytes
    vmem_limit = int(min(max(need + need // 2, 16 << 20), 64 << 20))

    out_flat = pl.pallas_call(
        functools.partial(_block_kernel, H, W),
        out_shape=jax.ShapeDtypeStruct((N, Cout, HW), jnp.float32),
        grid=(N,),
        in_specs=[
            pl.BlockSpec((1, Cin, HW), lambda n: (n, 0, 0)),      # x
            pl.BlockSpec((Cout, 9 * Cin), lambda n: (0, 0)),      # w1 (scale folded)
            pl.BlockSpec((Cout, 9 * Cout), lambda n: (0, 0)),     # w2 (scale folded)
            pl.BlockSpec((Cout, 1), lambda n: (0, 0)),            # b1
            pl.BlockSpec((Cout, 1), lambda n: (0, 0)),            # b2
            pl.BlockSpec((2, HW), lambda n: (0, 0)),              # row/col indices
        ],
        out_specs=pl.BlockSpec((1, Cout, HW), lambda n: (n, 0, 0)),
        scratch_shapes=[pltpu.VMEM((9 * Cout, HW), jnp.bfloat16)],
        compiler_params=pltpu.CompilerParams(
            dimension_semantics=("parallel",),
            vmem_limit_bytes=vmem_limit),
    )(x, w1, w2, b1, b2, idx)

    return out_flat.reshape(N, Cout, H, W)


def _reference(x_nchw, w1, g1, be1, m1, v1, w2, g2, be2, m2, v2, eps=1e-5):
    """Pure-JAX (lax.conv, f32) reference of the same forward, NCHW."""
    def conv(x, w):
        return lax.conv_general_dilated(
            x, w, window_strides=(1, 1), padding="SAME",
            dimension_numbers=("NCHW", "OIHW", "NCHW"))

    def bn(x, g, b, m, v):
        g = g.reshape(1, -1, 1, 1); b = b.reshape(1, -1, 1, 1)
        m = m.reshape(1, -1, 1, 1); v = v.reshape(1, -1, 1, 1)
        return g * (x - m) / jnp.sqrt(v + eps) + b

    out = jax.nn.relu(bn(conv(x_nchw, w1), g1, be1, m1, v1))
    out = bn(conv(out, w2), g2, be2, m2, v2)
    out = out + x_nchw  # identity shortcut (stride=1)
    return jax.nn.relu(out)


if __name__ == "__main__":
    key = jax.random.PRNGKey(0)
    ks = jax.random.split(key, 8)

    N, C, H, W = 2, 4, 16, 16          # in_planes=4, stride=1 -> planes=4
    x = jax.random.normal(ks[0], (N, C, H, W), jnp.float32)

    # conv weights (OIHW, no bias) and batchnorm params, deterministic init
    w1 = 0.1 * jax.random.normal(ks[1], (C, C, 3, 3), jnp.float32)
    w2 = 0.1 * jax.random.normal(ks[2], (C, C, 3, 3), jnp.float32)
    g1 = 1.0 + 0.1 * jax.random.normal(ks[3], (C,), jnp.float32)
    be1 = 0.1 * jax.random.normal(ks[4], (C,), jnp.float32)
    m1 = 0.05 * jax.random.normal(ks[5], (C,), jnp.float32)
    v1 = 1.0 + 0.1 * jax.nn.softplus(jax.random.normal(ks[6], (C,), jnp.float32))
    g2 = jnp.ones((C,), jnp.float32)
    be2 = jnp.zeros((C,), jnp.float32)
    m2 = 0.05 * jax.random.normal(ks[7], (C,), jnp.float32)
    v2 = jnp.ones((C,), jnp.float32) * 1.2

    out = basic_block_enc(x, w1, g1, be1, m1, v1, w2, g2, be2, m2, v2)
    out = jax.block_until_ready(out)

    ref = _reference(x, w1, g1, be1, m1, v1, w2, g2, be2, m2, v2)
    assert out.shape == (N, C, H, W)
    max_err = float(jnp.max(jnp.abs(out - ref)))
    # bf16 MXU operands (f32 accumulation) -> tolerance loosened accordingly.
    assert jnp.allclose(out, ref, atol=2e-2, rtol=2e-2), max_err

    print("KERNEL_OK")
</pallas_src>

<mosaic_0001>
module attributes {stable_mosaic.version = 11 : i64} {
  func.func @_block_kernel(%arg0: i32, %arg1: memref<1x4x256xf32, #tpu.memory_space<vmem>>, %arg2: memref<4x36xbf16, #tpu.memory_space<vmem>>, %arg3: memref<4x36xbf16, #tpu.memory_space<vmem>>, %arg4: memref<4x1xf32, #tpu.memory_space<vmem>>, %arg5: memref<4x1xf32, #tpu.memory_space<vmem>>, %arg6: memref<2x256xi32, #tpu.memory_space<vmem>>, %arg7: memref<1x4x256xf32, #tpu.memory_space<vmem>>, %arg8: memref<36x256xbf16, #tpu.memory_space<vmem>>) attributes {dimension_semantics = [#tpu.dimension_semantics<parallel>], iteration_bounds = array<i64: 2>, scalar_prefetch = 0 : i64, scratch_operands = 1 : i64, tpu.core_type = #tpu.core_type<tc>, window_params = [{transform_indices = @transform_0, window_bounds = array<i64: 1, 4, 256>}, {pipeline_mode = #tpu.pipeline_mode<synchronous>, transform_indices = @transform_1, window_bounds = array<i64: 4, 36>}, {pipeline_mode = #tpu.pipeline_mode<synchronous>, transform_indices = @transform_2, window_bounds = array<i64: 4, 36>}, {pipeline_mode = #tpu.pipeline_mode<synchronous>, transform_indices = @transform_3, window_bounds = array<i64: 4, 1>}, {pipeline_mode = #tpu.pipeline_mode<synchronous>, transform_indices = @transform_4, window_bounds = array<i64: 4, 1>}, {pipeline_mode = #tpu.pipeline_mode<synchronous>, transform_indices = @transform_5, window_bounds = array<i64: 2, 256>}, {transform_indices = @transform_6, window_bounds = array<i64: 1, 4, 256>}]} {
    %c0 = arith.constant 0 : index
    %c0_0 = arith.constant 0 : index
    %c0_1 = arith.constant 0 : index
    %0 = vector.load %arg1[%c0, %c0_0, %c0_1] : memref<1x4x256xf32, #tpu.memory_space<vmem>>, vector<1x4x256xf32>
    %1 = vector.shape_cast %0 : vector<1x4x256xf32> to vector<4x256xf32>
    %c0_2 = arith.constant 0 : index
    %c0_3 = arith.constant 0 : index
    %2 = vector.load %arg6[%c0_2, %c0_3] : memref<2x256xi32, #tpu.memory_space<vmem>>, vector<1x256xi32>
    %3 = vector.shape_cast %2 : vector<1x256xi32> to vector<1x256xi32>
    %4 = vector.broadcast %3 : vector<1x256xi32> to vector<4x256xi32>
    %c1 = arith.constant 1 : index
    %c0_4 = arith.constant 0 : index
    %5 = vector.load %arg6[%c1, %c0_4] : memref<2x256xi32, #tpu.memory_space<vmem>>, vector<1x256xi32>
    %6 = vector.shape_cast %5 : vector<1x256xi32> to vector<1x256xi32>
    %7 = vector.broadcast %6 : vector<1x256xi32> to vector<4x256xi32>
    %c1_i32 = arith.constant 1 : i32
    %8 = vector.broadcast %c1_i32 : i32 to vector<4x256xi32>
    %9 = arith.cmpi sge, %4, %8 : vector<4x256xi32>
    %c15_i32 = arith.constant 15 : i32
    %10 = vector.broadcast %c15_i32 : i32 to vector<4x256xi32>
    %11 = arith.cmpi slt, %4, %10 : vector<4x256xi32>
    %c1_i32_5 = arith.constant 1 : i32
    %12 = vector.broadcast %c1_i32_5 : i32 to vector<4x256xi32>
    %13 = arith.cmpi sge, %7, %12 : vector<4x256xi32>
    %c15_i32_6 = arith.constant 15 : i32
    %14 = vector.broadcast %c15_i32_6 : i32 to vector<4x256xi32>
    %15 = arith.cmpi slt, %7, %14 : vector<4x256xi32>
    %16 = arith.truncf %1 : vector<4x256xf32> to vector<4x256xbf16>
    %c16 = arith.constant 16 : index
    %c0_7 = arith.constant 0 : index
    %17 = vector.load %arg8[%c16, %c0_7] : memref<36x256xbf16, #tpu.memory_space<vmem>>, vector<4x256xbf16>
    tpu.vector_store %arg8[%c16, %c0_7], %16 {strides = array<i32>} : memref<36x256xbf16, #tpu.memory_space<vmem>>, vector<4x256xbf16>,
    %c17_i32 = arith.constant 17 : i32
    %18 = tpu.dynamic_rotate %1 by %c17_i32 dim 1 : vector<4x256xf32>, i32 -> vector<4x256xf32>
    %cst = arith.constant 0.000000e+00 : f32
    %19 = vector.broadcast %cst : f32 to vector<4x256xf32>
    %20 = arith.select %9, %18, %19 : vector<4x256xi1>, vector<4x256xf32>
    %cst_8 = arith.constant 0.000000e+00 : f32
    %21 = vector.broadcast %cst_8 : f32 to vector<4x256xf32>
    %22 = arith.select %13, %20, %21 : vector<4x256xi1>, vector<4x256xf32>
    %23 = arith.truncf %22 : vector<4x256xf32> to vector<4x256xbf16>
    %c0_9 = arith.constant 0 : index
    %c0_10 = arith.constant 0 : index
    %24 = vector.load %arg8[%c0_9, %c0_10] : memref<36x256xbf16, #tpu.memory_space<vmem>>, vector<4x256xbf16>
    tpu.vector_store %arg8[%c0_9, %c0_10], %23 {strides = array<i32>} : memref<36x256xbf16, #tpu.memory_space<vmem>>, vector<4x256xbf16>,
    %c16_i32 = arith.constant 16 : i32
    %25 = tpu.dynamic_rotate %1 by %c16_i32 dim 1 : vector<4x256xf32>, i32 -> vector<4x256xf32>
    %cst_11 = arith.constant 0.000000e+00 : f32
    %26 = vector.broadcast %cst_11 : f32 to vector<4x256xf32>
    %27 = arith.select %9, %25, %26 : vector<4x256xi1>, vector<4x256xf32>
    %28 = arith.truncf %27 : vector<4x256xf32> to vector<4x256xbf16>
    %c4 = arith.constant 4 : index
    %c0_12 = arith.constant 0 : index
    %29 = vector.load %arg8[%c4, %c0_12] : memref<36x256xbf16, #tpu.memory_space<vmem>>, vector<4x256xbf16>
    tpu.vector_store %arg8[%c4, %c0_12], %28 {strides = array<i32>} : memref<36x256xbf16, #tpu.memory_space<vmem>>, vector<4x256xbf16>,
    %c15_i32_13 = arith.constant 15 : i32
    %30 = tpu.dynamic_rotate %1 by %c15_i32_13 dim 1 : vector<4x256xf32>, i32 -> vector<4x256xf32>
    %cst_14 = arith.constant 0.000000e+00 : f32
    %31 = vector.broadcast %cst_14 : f32 to vector<4x256xf32>
    %32 = arith.select %9, %30, %31 : vector<4x256xi1>, vector<4x256xf32>
    %cst_15 = arith.constant 0.000000e+00 : f32
    %33 = vector.broadcast %cst_15 : f32 to vector<4x256xf32>
    %34 = arith.select %15, %32, %33 : vector<4x256xi1>, vector<4x256xf32>
    %35 = arith.truncf %34 : vector<4x256xf32> to vector<4x256xbf16>
    %c8 = arith.constant 8 : index
    %c0_16 = arith.constant 0 : index
    %36 = vector.load %arg8[%c8, %c0_16] : memref<36x256xbf16, #tpu.memory_space<vmem>>, vector<4x256xbf16>
    tpu.vector_store %arg8[%c8, %c0_16], %35 {strides = array<i32>} : memref<36x256xbf16, #tpu.memory_space<vmem>>, vector<4x256xbf16>,
    %c1_i32_17 = arith.constant 1 : i32
    %37 = tpu.dynamic_rotate %1 by %c1_i32_17 dim 1 : vector<4x256xf32>, i32 -> vector<4x256xf32>
    %cst_18 = arith.constant 0.000000e+00 : f32
    %38 = vector.broadcast %cst_18 : f32 to vector<4x256xf32>
    %39 = arith.select %13, %37, %38 : vector<4x256xi1>, vector<4x256xf32>
    %40 = arith.truncf %39 : vector<4x256xf32> to vector<4x256xbf16>
    %c12 = arith.constant 12 : index
    %c0_19 = arith.constant 0 : index
    %41 = vector.load %arg8[%c12, %c0_19] : memref<36x256xbf16, #tpu.memory_space<vmem>>, vector<4x256xbf16>
    tpu.vector_store %arg8[%c12, %c0_19], %40 {strides = array<i32>} : memref<36x256xbf16, #tpu.memory_space<vmem>>, vector<4x256xbf16>,
    %c255_i32 = arith.constant 255 : i32
    %42 = tpu.dynamic_rotate %1 by %c255_i32 dim 1 : vector<4x256xf32>, i32 -> vector<4x256xf32>
    %cst_20 = arith.constant 0.000000e+00 : f32
    %43 = vector.broadcast %cst_20 : f32 to vector<4x256xf32>
    %44 = arith.select %15, %42, %43 : vector<4x256xi1>, vector<4x256xf32>
    %45 = arith.truncf %44 : vector<4x256xf32> to vector<4x256xbf16>
    %c20 = arith.constant 20 : index
    %c0_21 = arith.constant 0 : index
    %46 = vector.load %arg8[%c20, %c0_21] : memref<36x256xbf16, #tpu.memory_space<vmem>>, vector<4x256xbf16>
    tpu.vector_store %arg8[%c20, %c0_21], %45 {strides = array<i32>} : memref<36x256xbf16, #tpu.memory_space<vmem>>, vector<4x256xbf16>,
    %c241_i32 = arith.constant 241 : i32
    %47 = tpu.dynamic_rotate %1 by %c241_i32 dim 1 : vector<4x256xf32>, i32 -> vector<4x256xf32>
    %cst_22 = arith.constant 0.000000e+00 : f32
    %48 = vector.broadcast %cst_22 : f32 to vector<4x256xf32>
    %49 = arith.select %11, %47, %48 : vector<4x256xi1>, vector<4x256xf32>
    %cst_23 = arith.constant 0.000000e+00 : f32
    %50 = vector.broadcast %cst_23 : f32 to vector<4x256xf32>
    %51 = arith.select %13, %49, %50 : vector<4x256xi1>, vector<4x256xf32>
    %52 = arith.truncf %51 : vector<4x256xf32> to vector<4x256xbf16>
    %c24 = arith.constant 24 : index
    %c0_24 = arith.constant 0 : index
    %53 = vector.load %arg8[%c24, %c0_24] : memref<36x256xbf16, #tpu.memory_space<vmem>>, vector<4x256xbf16>
    tpu.vector_store %arg8[%c24, %c0_24], %52 {strides = array<i32>} : memref<36x256xbf16, #tpu.memory_space<vmem>>, vector<4x256xbf16>,
    %c240_i32 = arith.constant 240 : i32
    %54 = tpu.dynamic_rotate %1 by %c240_i32 dim 1 : vector<4x256xf32>, i32 -> vector<4x256xf32>
    %cst_25 = arith.constant 0.000000e+00 : f32
    %55 = vector.broadcast %cst_25 : f32 to vector<4x256xf32>
    %56 = arith.select %11, %54, %55 : vector<4x256xi1>, vector<4x256xf32>
    %57 = arith.truncf %56 : vector<4x256xf32> to vector<4x256xbf16>
    %c28 = arith.constant 28 : index
    %c0_26 = arith.constant 0 : index
    %58 = vector.load %arg8[%c28, %c0_26] : memref<36x256xbf16, #tpu.memory_space<vmem>>, vector<4x256xbf16>
    tpu.vector_store %arg8[%c28, %c0_26], %57 {strides = array<i32>} : memref<36x256xbf16, #tpu.memory_space<vmem>>, vector<4x256xbf16>,
    %c239_i32 = arith.constant 239 : i32
    %59 = tpu.dynamic_rotate %1 by %c239_i32 dim 1 : vector<4x256xf32>, i32 -> vector<4x256xf32>
    %cst_27 = arith.constant 0.000000e+00 : f32
    %60 = vector.broadcast %cst_27 : f32 to vector<4x256xf32>
    %61 = arith.select %11, %59, %60 : vector<4x256xi1>, vector<4x256xf32>
    %cst_28 = arith.constant 0.000000e+00 : f32
    %62 = vector.broadcast %cst_28 : f32 to vector<4x256xf32>
    %63 = arith.select %15, %61, %62 : vector<4x256xi1>, vector<4x256xf32>
    %64 = arith.truncf %63 : vector<4x256xf32> to vector<4x256xbf16>
    %c32 = arith.constant 32 : index
    %c0_29 = arith.constant 0 : index
    %65 = vector.load %arg8[%c32, %c0_29] : memref<36x256xbf16, #tpu.memory_space<vmem>>, vector<4x256xbf16>
    tpu.vector_store %arg8[%c32, %c0_29], %64 {strides = array<i32>} : memref<36x256xbf16, #tpu.memory_space<vmem>>, vector<4x256xbf16>,
    %c0_30 = arith.constant 0 : index
    %c0_31 = arith.constant 0 : index
    %66 = vector.load %arg2[%c0_30, %c0_31] : memref<4x36xbf16, #tpu.memory_space<vmem>>, vector<4x36xbf16>
    %c0_32 = arith.constant 0 : index
    %c0_33 = arith.constant 0 : index
    %67 = vector.load %arg8[%c0_32, %c0_33] : memref<36x256xbf16, #tpu.memory_space<vmem>>, vector<36x256xbf16>
    %cst_34 = arith.constant dense<0.000000e+00> : vector<4x256xf32>
    %68 = tpu.matmul %66, %67, %cst_34 {dimension_numbers = #tpu.dot_dimension_numbers<[1], [0], [0], [1], [0, 0, 1, 1], [], []>} : vector<4x36xbf16>, vector<36x256xbf16>, vector<4x256xf32> -> vector<4x256xf32>
    %c0_35 = arith.constant 0 : index
    %c0_36 = arith.constant 0 : index
    %69 = vector.load %arg4[%c0_35, %c0_36] : memref<4x1xf32, #tpu.memory_space<vmem>>, vector<4x1xf32>
    %70 = vector.broadcast %69 : vector<4x1xf32> to vector<4x256xf32>
    %71 = arith.addf %68, %70 : vector<4x256xf32>
    %cst_37 = arith.constant 0.000000e+00 : f32
    %72 = vector.broadcast %cst_37 : f32 to vector<4x256xf32>
    %73 = arith.maximumf %71, %72 : vector<4x256xf32>
    %c0_38 = arith.constant 0 : index
    %c0_39 = arith.constant 0 : index
    %74 = vector.load %arg6[%c0_38, %c0_39] : memref<2x256xi32, #tpu.memory_space<vmem>>, vector<1x256xi32>
    %75 = vector.shape_cast %74 : vector<1x256xi32> to vector<1x256xi32>
    %76 = vector.broadcast %75 : vector<1x256xi32> to vector<4x256xi32>
    %c1_40 = arith.constant 1 : index
    %c0_41 = arith.constant 0 : index
    %77 = vector.load %arg6[%c1_40, %c0_41] : memref<2x256xi32, #tpu.memory_space<vmem>>, vector<1x256xi32>
    %78 = vector.shape_cast %77 : vector<1x256xi32> to vector<1x256xi32>
    %79 = vector.broadcast %78 : vector<1x256xi32> to vector<4x256xi32>
    %c1_i32_42 = arith.constant 1 : i32
    %80 = vector.broadcast %c1_i32_42 : i32 to vector<4x256xi32>
    %81 = arith.cmpi sge, %76, %80 : vector<4x256xi32>
    %c15_i32_43 = arith.constant 15 : i32
    %82 = vector.broadcast %c15_i32_43 : i32 to vector<4x256xi32>
    %83 = arith.cmpi slt, %76, %82 : vector<4x256xi32>
    %c1_i32_44 = arith.constant 1 : i32
    %84 = vector.broadcast %c1_i32_44 : i32 to vector<4x256xi32>
    %85 = arith.cmpi sge, %79, %84 : vector<4x256xi32>
    %c15_i32_45 = arith.constant 15 : i32
    %86 = vector.broadcast %c15_i32_45 : i32 to vector<4x256xi32>
    %87 = arith.cmpi slt, %79, %86 : vector<4x256xi32>
    %88 = arith.truncf %73 : vector<4x256xf32> to vector<4x256xbf16>
    %c16_46 = arith.constant 16 : index
    %c0_47 = arith.constant 0 : index
    %89 = vector.load %arg8[%c16_46, %c0_47] : memref<36x256xbf16, #tpu.memory_space<vmem>>, vector<4x256xbf16>
    tpu.vector_store %arg8[%c16_46, %c0_47], %88 {strides = array<i32>} : memref<36x256xbf16, #tpu.memory_space<vmem>>, vector<4x256xbf16>,
    %c17_i32_48 = arith.constant 17 : i32
    %90 = tpu.dynamic_rotate %73 by %c17_i32_48 dim 1 : vector<4x256xf32>, i32 -> vector<4x256xf32>
    %cst_49 = arith.constant 0.000000e+00 : f32
    %91 = vector.broadcast %cst_49 : f32 to vector<4x256xf32>
    %92 = arith.select %81, %90, %91 : vector<4x256xi1>, vector<4x256xf32>
    %cst_50 = arith.constant 0.000000e+00 : f32
    %93 = vector.broadcast %cst_50 : f32 to vector<4x256xf32>
    %94 = arith.select %85, %92, %93 : vector<4x256xi1>, vector<4x256xf32>
    %95 = arith.truncf %94 : vector<4x256xf32> to vector<4x256xbf16>
    %c0_51 = arith.constant 0 : index
    %c0_52 = arith.constant 0 : index
    %96 = vector.load %arg8[%c0_51, %c0_52] : memref<36x256xbf16, #tpu.memory_space<vmem>>, vector<4x256xbf16>
    tpu.vector_store %arg8[%c0_51, %c0_52], %95 {strides = array<i32>} : memref<36x256xbf16, #tpu.memory_space<vmem>>, vector<4x256xbf16>,
    %c16_i32_53 = arith.constant 16 : i32
    %97 = tpu.dynamic_rotate %73 by %c16_i32_53 dim 1 : vector<4x256xf32>, i32 -> vector<4x256xf32>
    %cst_54 = arith.constant 0.000000e+00 : f32
    %98 = vector.broadcast %cst_54 : f32 to vector<4x256xf32>
    %99 = arith.select %81, %97, %98 : vector<4x256xi1>, vector<4x256xf32>
    %100 = arith.truncf %99 : vector<4x256xf32> to vector<4x256xbf16>
    %c4_55 = arith.constant 4 : index
    %c0_56 = arith.constant 0 : index
    %101 = vector.load %arg8[%c4_55, %c0_56] : memref<36x256xbf16, #tpu.memory_space<vmem>>, vector<4x256xbf16>
    tpu.vector_store %arg8[%c4_55, %c0_56], %100 {strides = array<i32>} : memref<36x256xbf16, #tpu.memory_space<vmem>>, vector<4x256xbf16>,
    %c15_i32_57 = arith.constant 15 : i32
    %102 = tpu.dynamic_rotate %73 by %c15_i32_57 dim 1 : vector<4x256xf32>, i32 -> vector<4x256xf32>
    %cst_58 = arith.constant 0.000000e+00 : f32
    %103 = vector.broadcast %cst_58 : f32 to vector<4x256xf32>
    %104 = arith.select %81, %102, %103 : vector<4x256xi1>, vector<4x256xf32>
    %cst_59 = arith.constant 0.000000e+00 : f32
    %105 = vector.broadcast %cst_59 : f32 to vector<4x256xf32>
    %106 = arith.select %87, %104, %105 : vector<4x256xi1>, vector<4x256xf32>
    %107 = arith.truncf %106 : vector<4x256xf32> to vector<4x256xbf16>
    %c8_60 = arith.constant 8 : index
    %c0_61 = arith.constant 0 : index
    %108 = vector.load %arg8[%c8_60, %c0_61] : memref<36x256xbf16, #tpu.memory_space<vmem>>, vector<4x256xbf16>
    tpu.vector_store %arg8[%c8_60, %c0_61], %107 {strides = array<i32>} : memref<36x256xbf16, #tpu.memory_space<vmem>>, vector<4x256xbf16>,
    %c1_i32_62 = arith.constant 1 : i32
    %109 = tpu.dynamic_rotate %73 by %c1_i32_62 dim 1 : vector<4x256xf32>, i32 -> vector<4x256xf32>
    %cst_63 = arith.constant 0.000000e+00 : f32
    %110 = vector.broadcast %cst_63 : f32 to vector<4x256xf32>
    %111 = arith.select %85, %109, %110 : vector<4x256xi1>, vector<4x256xf32>
    %112 = arith.truncf %111 : vector<4x256xf32> to vector<4x256xbf16>
    %c12_64 = arith.constant 12 : index
    %c0_65 = arith.constant 0 : index
    %113 = vector.load %arg8[%c12_64, %c0_65] : memref<36x256xbf16, #tpu.memory_space<vmem>>, vector<4x256xbf16>
    tpu.vector_store %arg8[%c12_64, %c0_65], %112 {strides = array<i32>} : memref<36x256xbf16, #tpu.memory_space<vmem>>, vector<4x256xbf16>,
    %c255_i32_66 = arith.constant 255 : i32
    %114 = tpu.dynamic_rotate %73 by %c255_i32_66 dim 1 : vector<4x256xf32>, i32 -> vector<4x256xf32>
    %cst_67 = arith.constant 0.000000e+00 : f32
    %115 = vector.broadcast %cst_67 : f32 to vector<4x256xf32>
    %116 = arith.select %87, %114, %115 : vector<4x256xi1>, vector<4x256xf32>
    %117 = arith.truncf %116 : vector<4x256xf32> to vector<4x256xbf16>
    %c20_68 = arith.constant 20 : index
    %c0_69 = arith.constant 0 : index
    %118 = vector.load %arg8[%c20_68, %c0_69] : memref<36x256xbf16, #tpu.memory_space<vmem>>, vector<4x256xbf16>
    tpu.vector_store %arg8[%c20_68, %c0_69], %117 {strides = array<i32>} : memref<36x256xbf16, #tpu.memory_space<vmem>>, vector<4x256xbf16>,
    %c241_i32_70 = arith.constant 241 : i32
    %119 = tpu.dynamic_rotate %73 by %c241_i32_70 dim 1 : vector<4x256xf32>, i32 -> vector<4x256xf32>
    %cst_71 = arith.constant 0.000000e+00 : f32
    %120 = vector.broadcast %cst_71 : f32 to vector<4x256xf32>
    %121 = arith.select %83, %119, %120 : vector<4x256xi1>, vector<4x256xf32>
    %cst_72 = arith.constant 0.000000e+00 : f32
    %122 = vector.broadcast %cst_72 : f32 to vector<4x256xf32>
    %123 = arith.select %85, %121, %122 : vector<4x256xi1>, vector<4x256xf32>
    %124 = arith.truncf %123 : vector<4x256xf32> to vector<4x256xbf16>
    %c24_73 = arith.constant 24 : index
    %c0_74 = arith.constant 0 : index
    %125 = vector.load %arg8[%c24_73, %c0_74] : memref<36x256xbf16, #tpu.memory_space<vmem>>, vector<4x256xbf16>
    tpu.vector_store %arg8[%c24_73, %c0_74], %124 {strides = array<i32>} : memref<36x256xbf16, #tpu.memory_space<vmem>>, vector<4x256xbf16>,
    %c240_i32_75 = arith.constant 240 : i32
    %126 = tpu.dynamic_rotate %73 by %c240_i32_75 dim 1 : vector<4x256xf32>, i32 -> vector<4x256xf32>
    %cst_76 = arith.constant 0.000000e+00 : f32
    %127 = vector.broadcast %cst_76 : f32 to vector<4x256xf32>
    %128 = arith.select %83, %126, %127 : vector<4x256xi1>, vector<4x256xf32>
    %129 = arith.truncf %128 : vector<4x256xf32> to vector<4x256xbf16>
    %c28_77 = arith.constant 28 : index
    %c0_78 = arith.constant 0 : index
    %130 = vector.load %arg8[%c28_77, %c0_78] : memref<36x256xbf16, #tpu.memory_space<vmem>>, vector<4x256xbf16>
    tpu.vector_store %arg8[%c28_77, %c0_78], %129 {strides = array<i32>} : memref<36x256xbf16, #tpu.memory_space<vmem>>, vector<4x256xbf16>,
    %c239_i32_79 = arith.constant 239 : i32
    %131 = tpu.dynamic_rotate %73 by %c239_i32_79 dim 1 : vector<4x256xf32>, i32 -> vector<4x256xf32>
    %cst_80 = arith.constant 0.000000e+00 : f32
    %132 = vector.broadcast %cst_80 : f32 to vector<4x256xf32>
    %133 = arith.select %83, %131, %132 : vector<4x256xi1>, vector<4x256xf32>
    %cst_81 = arith.constant 0.000000e+00 : f32
    %134 = vector.broadcast %cst_81 : f32 to vector<4x256xf32>
    %135 = arith.select %87, %133, %134 : vector<4x256xi1>, vector<4x256xf32>
    %136 = arith.truncf %135 : vector<4x256xf32> to vector<4x256xbf16>
    %c32_82 = arith.constant 32 : index
    %c0_83 = arith.constant 0 : index
    %137 = vector.load %arg8[%c32_82, %c0_83] : memref<36x256xbf16, #tpu.memory_space<vmem>>, vector<4x256xbf16>
    tpu.vector_store %arg8[%c32_82, %c0_83], %136 {strides = array<i32>} : memref<36x256xbf16, #tpu.memory_space<vmem>>, vector<4x256xbf16>,
    %c0_84 = arith.constant 0 : index
    %c0_85 = arith.constant 0 : index
    %138 = vector.load %arg3[%c0_84, %c0_85] : memref<4x36xbf16, #tpu.memory_space<vmem>>, vector<4x36xbf16>
    %c0_86 = arith.constant 0 : index
    %c0_87 = arith.constant 0 : index
    %139 = vector.load %arg8[%c0_86, %c0_87] : memref<36x256xbf16, #tpu.memory_space<vmem>>, vector<36x256xbf16>
    %cst_88 = arith.constant dense<0.000000e+00> : vector<4x256xf32>
    %140 = tpu.matmul %138, %139, %cst_88 {dimension_numbers = #tpu.dot_dimension_numbers<[1], [0], [0], [1], [0, 0, 1, 1], [], []>} : vector<4x36xbf16>, vector<36x256xbf16>, vector<4x256xf32> -> vector<4x256xf32>
    %c0_89 = arith.constant 0 : index
    %c0_90 = arith.constant 0 : index
    %141 = vector.load %arg5[%c0_89, %c0_90] : memref<4x1xf32, #tpu.memory_space<vmem>>, vector<4x1xf32>
    %142 = vector.broadcast %141 : vector<4x1xf32> to vector<4x256xf32>
    %143 = arith.addf %140, %142 : vector<4x256xf32>
    %c0_91 = arith.constant 0 : index
    %c0_92 = arith.constant 0 : index
    %c0_93 = arith.constant 0 : index
    %144 = vector.load %arg1[%c0_91, %c0_92, %c0_93] : memref<1x4x256xf32, #tpu.memory_space<vmem>>, vector<1x4x256xf32>
    %145 = vector.shape_cast %144 : vector<1x4x256xf32> to vector<4x256xf32>
    %146 = arith.addf %143, %145 : vector<4x256xf32>
    %cst_94 = arith.constant 0.000000e+00 : f32
    %147 = vector.broadcast %cst_94 : f32 to vector<4x256xf32>
    %148 = arith.maximumf %146, %147 : vector<4x256xf32>
    %c0_95 = arith.constant 0 : index
    %c0_96 = arith.constant 0 : index
    %c0_97 = arith.constant 0 : index
    %149 = vector.load %arg7[%c0_95, %c0_96, %c0_97] : memref<1x4x256xf32, #tpu.memory_space<vmem>>, vector<1x4x256xf32>
    %150 = vector.shape_cast %149 : vector<1x4x256xf32> to vector<4x256xf32>
    %151 = vector.shape_cast %148 : vector<4x256xf32> to vector<1x4x256xf32>
    tpu.vector_store %arg7[%c0_95, %c0_96, %c0_97], %151 {strides = array<i32>} : memref<1x4x256xf32, #tpu.memory_space<vmem>>, vector<1x4x256xf32>,
    return
  }
  func.func @transform_0(%arg0: i32) -> (i32, i32, i32) {
    %c0_i32 = arith.constant 0 : i32
    %c0_i32_0 = arith.constant 0 : i32
    %c0_i32_1 = arith.constant 0 : i32
    return %arg0, %c0_i32, %c0_i32_0 : i32, i32, i32
  }
  func.func @transform_1(%arg0: i32) -> (i32, i32) {
    %c0_i32 = arith.constant 0 : i32
    %c0_i32_0 = arith.constant 0 : i32
    %c0_i32_1 = arith.constant 0 : i32
    return %c0_i32, %c0_i32_0 : i32, i32
  }
  func.func @transform_2(%arg0: i32) -> (i32, i32) {
    %c0_i32 = arith.constant 0 : i32
    %c0_i32_0 = arith.constant 0 : i32
    %c0_i32_1 = arith.constant 0 : i32
    return %c0_i32, %c0_i32_0 : i32, i32
  }
  func.func @transform_3(%arg0: i32) -> (i32, i32) {
    %c0_i32 = arith.constant 0 : i32
    %c0_i32_0 = arith.constant 0 : i32
    %c0_i32_1 = arith.constant 0 : i32
    return %c0_i32, %c0_i32_0 : i32, i32
  }
  func.func @transform_4(%arg0: i32) -> (i32, i32) {
    %c0_i32 = arith.constant 0 : i32
    %c0_i32_0 = arith.constant 0 : i32
    %c0_i32_1 = arith.constant 0 : i32
    return %c0_i32, %c0_i32_0 : i32, i32
  }
  func.func @transform_5(%arg0: i32) -> (i32, i32) {
    %c0_i32 = arith.constant 0 : i32
    %c0_i32_0 = arith.constant 0 : i32
    %c0_i32_1 = arith.constant 0 : i32
    return %c0_i32, %c0_i32_0 : i32, i32
  }
  func.func @transform_6(%arg0: i32) -> (i32, i32, i32) {
    %c0_i32 = arith.constant 0 : i32
    %c0_i32_0 = arith.constant 0 : i32
    %c0_i32_1 = arith.constant 0 : i32
    return %arg0, %c0_i32, %c0_i32_0 : i32, i32, i32
  }
}

</mosaic_0001>

<llo_original>
// kernel: basic_block_enc.1
$region0: #{basic_block_enc.1}
  #allocation0 [shape = 'u32[]', space=smem, size = 0x4, offset = 0x4, fixed_abs, tag = 'smem constant byte address 0x4 - core index']
  #allocation1 [shape = 'u32[144,128]{1,0:T(1,128)}', space=vmem, size = 0x12000, scoped, tag = 'internal scratch']
  #allocation2 [shape = 'bf16[36,256]{1,0:T(8,128)(2,1)}', space=vmem, size = 0x5000, scoped, tag = 'scratch operand']
  %s0 = inlined_call_operand.vmem [shape: f32[2,4,256], index: 0, kind: input, shape index: {}]
  %s1 = inlined_call_operand.vmem [shape: bf16[4,36], index: 1, kind: input, shape index: {}]
  %s2 = inlined_call_operand.vmem [shape: bf16[4,36], index: 2, kind: input, shape index: {}]
  %s3 = inlined_call_operand.vmem [shape: f32[4,1], index: 3, kind: input, shape index: {}]
  %s4 = inlined_call_operand.vmem [shape: f32[4,1], index: 4, kind: input, shape index: {}]
  %s5 = inlined_call_operand.vmem [shape: s32[2,256], index: 5, kind: input, shape index: {}]
  %s6 = inlined_call_operand.vmem [shape: f32[2,4,256], index: 6, kind: output, shape index: {}]
  %s7 = sld [smem:[#allocation0]]
  $region57: #{basic_block_enc.1} parent=0
    _
  %s9 = ssub.s32 1, %s7
  %s10 = scalar_select 0, %s9, %s7
  loop: start=0, step=1, limit=4
  $region2: #{basic_block_enc.1} parent=0 // loop_pre_header
    _
  $region3: #{basic_block_enc.1} parent=0 // loop_header
    %s12 = sphi 0, %s16
    %p13 = scmp.ge.s32.totalorder %s12, 4
    %s22 = sphi 0, %s24
    %s25 = sphi 0, %s22
    %s26 = sphi 0, %s25
    %s42 = sphi 0, %s26
    %s46 = sphi 0, %s46
    %s48 = sphi 0, %s46
    %s49 = sphi 0, %s48
    %s63 = sphi 0, %s49
    %s67 = sphi 0, %s67
    %s69 = sphi 0, %s67
    %s70 = sphi 0, %s69
    %s84 = sphi 0, %s70
    %s88 = sphi 0, %s88
    %s90 = sphi 0, %s88
    %s91 = sphi 0, %s90
    %s105 = sphi 0, %s91
    %s109 = sphi 0, %s109
    %s111 = sphi 0, %s109
    %s112 = sphi 0, %s111
    %s126 = sphi 0, %s112
    %s130 = sphi 0, %s130
    %s132 = sphi 0, %s130
    %s133 = sphi 0, %s132
    %s147 = sphi 0, %s133
    %s153 = sphi 0, %s155
    %s156 = sphi 0, %s153
    %s157 = sphi 0, %s156
    %s173 = sphi 0, %s157
  $region4: #{basic_block_enc.1} parent=0 // loop_header_branch
    %15 = sbr.rel (%p13) target = $region8
  $region5: #{basic_block_enc.1} parent=0 // loop_body
    %s17 = ssub.s32 %s12, 1
    %s18 = ssub.s32 %s12, 2
    %s19 = sadd.s32 %s12, 1
    %s20 = ssub.s32 %s12, %s19
    %p21 = scmp.eq.s32.totalorder %s20, 0
    %s23 = sadd.s32 %s22, 1
    %s24 = scalar_select %p21, %s22, %s23
    %p27 = pneg %p21
    %p28 = scmp.eq.s32.totalorder %s12, 1
    %p29 = por %p27, %p28
    %p30 = scmp.ne.s32.totalorder %s22, %s25
    %p31 = scmp.eq.s32.totalorder %s12, 0
    %p32 = por %p30, %p31
    %p33 = scmp.ne.s32.totalorder %s22, %s25
    %p34 = scmp.eq.s32.totalorder %s17, 1
    %p35 = por %p33, %p34
    %p36 = scmp.ne.s32.totalorder %s25, %s26
    %p37 = scmp.eq.s32.totalorder %s17, 0
    %p38 = por %p36, %p37
    %p39 = scmp.ne.s32.totalorder %s25, %s26
    %p40 = scmp.eq.s32.totalorder %s18, 1
    %p41 = por %p39, %p40
    %p43 = scmp.ne.s32.totalorder %s26, %s42
    %p44 = scmp.eq.s32.totalorder %s18, 0
    %p45 = por %p43, %p44
    %s47 = sadd.s32 %s46, 1
    %p50 = scmp.eq.s32.totalorder %s12, 1
    %p51 = scmp.ne.s32.totalorder %s46, %s48
    %p52 = scmp.eq.s32.totalorder %s12, 0
    %p53 = por %p51, %p52
    %p54 = scmp.ne.s32.totalorder %s46, %s48
    %p55 = scmp.eq.s32.totalorder %s17, 1
    %p56 = por %p54, %p55
    %p57 = scmp.ne.s32.totalorder %s48, %s49
    %p58 = scmp.eq.s32.totalorder %s17, 0
    %p59 = por %p57, %p58
    %p60 = scmp.ne.s32.totalorder %s48, %s49
    %p61 = scmp.eq.s32.totalorder %s18, 1
    %p62 = por %p60, %p61
    %p64 = scmp.ne.s32.totalorder %s49, %s63
    %p65 = scmp.eq.s32.totalorder %s18, 0
    %p66 = por %p64, %p65
    %s68 = sadd.s32 %s67, 1
    %p71 = scmp.eq.s32.totalorder %s12, 1
    %p72 = scmp.ne.s32.totalorder %s67, %s69
    %p73 = scmp.eq.s32.totalorder %s12, 0
    %p74 = por %p72, %p73
    %p75 = scmp.ne.s32.totalorder %s67, %s69
    %p76 = scmp.eq.s32.totalorder %s17, 1
    %p77 = por %p75, %p76
    %p78 = scmp.ne.s32.totalorder %s69, %s70
    %p79 = scmp.eq.s32.totalorder %s17, 0
    %p80 = por %p78, %p79
    %p81 = scmp.ne.s32.totalorder %s69, %s70
    %p82 = scmp.eq.s32.totalorder %s18, 1
    %p83 = por %p81, %p82
    %p85 = scmp.ne.s32.totalorder %s70, %s84
    %p86 = scmp.eq.s32.totalorder %s18, 0
    %p87 = por %p85, %p86
    %s89 = sadd.s32 %s88, 1
    %p92 = scmp.eq.s32.totalorder %s12, 1
    %p93 = scmp.ne.s32.totalorder %s88, %s90
    %p94 = scmp.eq.s32.totalorder %s12, 0
    %p95 = por %p93, %p94
    %p96 = scmp.ne.s32.totalorder %s88, %s90
    %p97 = scmp.eq.s32.totalorder %s17, 1
    %p98 = por %p96, %p97
    %p99 = scmp.ne.s32.totalorder %s90, %s91
    %p100 = scmp.eq.s32.totalorder %s17, 0
    %p101 = por %p99, %p100
    %p102 = scmp.ne.s32.totalorder %s90, %s91
    %p103 = scmp.eq.s32.totalorder %s18, 1
    %p104 = por %p102, %p103
    %p106 = scmp.ne.s32.totalorder %s91, %s105
    %p107 = scmp.eq.s32.totalorder %s18, 0
    %p108 = por %p106, %p107
    %s110 = sadd.s32 %s109, 1
    %p113 = scmp.eq.s32.totalorder %s12, 1
    %p114 = scmp.ne.s32.totalorder %s109, %s111
    %p115 = scmp.eq.s32.totalorder %s12, 0
    %p116 = por %p114, %p115
    %p117 = scmp.ne.s32.totalorder %s109, %s111
    %p118 = scmp.eq.s32.totalorder %s17, 1
    %p119 = por %p117, %p118
    %p120 = scmp.ne.s32.totalorder %s111, %s112
    %p121 = scmp.eq.s32.totalorder %s17, 0
    %p122 = por %p120, %p121
    %p123 = scmp.ne.s32.totalorder %s111, %s112
    %p124 = scmp.eq.s32.totalorder %s18, 1
    %p125 = por %p123, %p124
    %p127 = scmp.ne.s32.totalorder %s112, %s126
    %p128 = scmp.eq.s32.totalorder %s18, 0
    %p129 = por %p127, %p128
    %s131 = sadd.s32 %s130, 1
    %p134 = scmp.eq.s32.totalorder %s12, 1
    %p135 = scmp.ne.s32.totalorder %s130, %s132
    %p136 = scmp.eq.s32.totalorder %s12, 0
    %p137 = por %p135, %p136
    %p138 = scmp.ne.s32.totalorder %s130, %s132
    %p139 = scmp.eq.s32.totalorder %s17, 1
    %p140 = por %p138, %p139
    %p141 = scmp.ne.s32.totalorder %s132, %s133
    %p142 = scmp.eq.s32.totalorder %s17, 0
    %p143 = por %p141, %p142
    %p144 = scmp.ne.s32.totalorder %s132, %s133
    %p145 = scmp.eq.s32.totalorder %s18, 1
    %p146 = por %p144, %p145
    %p148 = scmp.ne.s32.totalorder %s133, %s147
    %p149 = scmp.eq.s32.totalorder %s18, 0
    %p150 = por %p148, %p149
    %s151 = ssub.s32 %s12, %s19
    %p152 = scmp.eq.s32.totalorder %s151, 0
    %s154 = sadd.s32 %s153, 1
    %s155 = scalar_select %p152, %s153, %s154
    %p158 = pneg %p152
    %p159 = scmp.eq.s32.totalorder %s12, 1
    %p160 = por %p158, %p159
    %p161 = scmp.ne.s32.totalorder %s153, %s156
    %p162 = scmp.eq.s32.totalorder %s12, 0
    %p163 = por %p161, %p162
    %p164 = scmp.ne.s32.totalorder %s153, %s156
    %p165 = scmp.eq.s32.totalorder %s17, 1
    %p166 = por %p164, %p165
    %p167 = scmp.ne.s32.totalorder %s156, %s157
    %p168 = scmp.eq.s32.totalorder %s17, 0
    %p169 = por %p167, %p168
    %p170 = scmp.ne.s32.totalorder %s156, %s157
    %p171 = scmp.eq.s32.totalorder %s18, 1
    %p172 = por %p170, %p171
    %p174 = scmp.ne.s32.totalorder %s157, %s173
    %p175 = scmp.eq.s32.totalorder %s18, 0
    %p176 = por %p174, %p175
    %p177 = scmp.le.s32.totalorder 1, %s12
    %p178 = scmp.lt.s32.totalorder %s12, 3
    %p179 = pnand %p177, %p178
    %p180 = pneg %p179
    // Predicated region
    $region9: #{basic_block_enc.1} parent=5 // pred_check
      _
    $region10: #{basic_block_enc.1} parent=5 // pred_check_branch
      %182 = sbr.rel (%p179) target = $region12
    $region11: #{basic_block_enc.1} parent=5 // pred_region
      %s183 = ssub.s32 %s12, 1
      // Predicated region
      $region13: #{basic_block_enc.1} parent=11 // pred_check
        %p184 = pneg %p59
      $region14: #{basic_block_enc.1} parent=11 // pred_check_branch
        %186 = sbr.rel (%p184) target = $region16
      $region15: #{basic_block_enc.1} parent=11 // pred_region
        _
      $region16: #{basic_block_enc.1} parent=11 // pred_fallthru
        _
      // Predicated region
      $region17: #{basic_block_enc.1} parent=11 // pred_check
        %p187 = pneg %p80
      $region18: #{basic_block_enc.1} parent=11 // pred_check_branch
        %189 = sbr.rel (%p187) target = $region20
      $region19: #{basic_block_enc.1} parent=11 // pred_region
        _
      $region20: #{basic_block_enc.1} parent=11 // pred_fallthru
        _
      // Predicated region
      $region21: #{basic_block_enc.1} parent=11 // pred_check
        %p190 = pneg %p101
      $region22: #{basic_block_enc.1} parent=11 // pred_check_branch
        %192 = sbr.rel (%p190) target = $region24
      $region23: #{basic_block_enc.1} parent=11 // pred_region
        _
      $region24: #{basic_block_enc.1} parent=11 // pred_fallthru
        _
      // Predicated region
      $region25: #{basic_block_enc.1} parent=11 // pred_check
        %p193 = pneg %p122
      $region26: #{basic_block_enc.1} parent=11 // pred_check_branch
        %195 = sbr.rel (%p193) target = $region28
      $region27: #{basic_block_enc.1} parent=11 // pred_region
        _
      $region28: #{basic_block_enc.1} parent=11 // pred_fallthru
        _
      // Predicated region
      $region29: #{basic_block_enc.1} parent=11 // pred_check
        %p196 = pneg %p143
      $region30: #{basic_block_enc.1} parent=11 // pred_check_branch
        %198 = sbr.rel (%p196) target = $region32
      $region31: #{basic_block_enc.1} parent=11 // pred_region
        _
      $region32: #{basic_block_enc.1} parent=11 // pred_fallthru
        _
    $region12: #{basic_block_enc.1} parent=5 // pred_fallthru
      _
    %p199 = scmp.lt.s32.totalorder %s12, 2
    // Predicated region
    $region33: #{basic_block_enc.1} parent=5 // pred_check
      %p200 = pneg %p199
    $region34: #{basic_block_enc.1} parent=5 // pred_check_branch
      %202 = sbr.rel (%p200) target = $region36
    $region35: #{basic_block_enc.1} parent=5 // pred_region
      // Predicated region
      $region37: #{basic_block_enc.1} parent=35 // pred_check
        %p203 = pneg %p32
      $region38: #{basic_block_enc.1} parent=35 // pred_check_branch
        %205 = sbr.rel (%p203) target = $region40
      $region39: #{basic_block_enc.1} parent=35 // pred_region
        %p206 = scmp.lt.s32.totalorder %s12, 1
        %s207 = scalar_select %p206, %s12, 1
        %s208 = smul.addr %s207, 2
        %s209 = smul.addr %s208, 4
        %s210 = scalar_lea.vmem %s0, %s209
      $region40: #{basic_block_enc.1} parent=35 // pred_fallthru
        _
    $region36: #{basic_block_enc.1} parent=5 // pred_fallthru
      _
    %p211 = scmp.le.s32.totalorder 1, %s12
    %p212 = scmp.lt.s32.totalorder %s12, 3
    %p213 = pnand %p211, %p212
    %p214 = pneg %p213
    // Predicated region
    $region41: #{basic_block_enc.1} parent=5 // pred_check
      _
    $region42: #{basic_block_enc.1} parent=5 // pred_check_branch
      %216 = sbr.rel (%p213) target = $region44
    $region43: #{basic_block_enc.1} parent=5 // pred_region
      %s217 = ssub.s32 %s12, 1
      %p218 = scmp.lt.s32.totalorder %s17, 1
      %s219 = scalar_select %p218, %s17, 1
      %s220 = smul.addr %s219, 2
      %s221 = smul.addr %s220, 4
      %s222 = scalar_lea.vmem %s0, %s221
      %p223 = pneg %p38
      %p224 = pneg %p35
      %p225 = pneg %p59
      %p226 = pneg %p56
      %p227 = pneg %p80
      %p228 = pneg %p77
      %p229 = pneg %p101
      %p230 = pneg %p98
      %p231 = pneg %p122
      %p232 = pneg %p119
      %p233 = pneg %p143
      %p234 = pneg %p140
      %p235 = pneg %p169
      %p236 = pneg %p166
      %p237 = scmp.lt.s32.totalorder %s17, 1
      %s238 = scalar_select %p237, %s17, 1
      %s239 = smul.addr %s238, 2
      %s240 = smul.addr %s239, 4
      %s241 = scalar_lea.vmem %s6, %s240
      %p242 = scmp.lt.s32.totalorder %s17, 1
      %s243 = scalar_select %p242, %s17, 1
      %s244 = smul.addr %s243, 2
      %s245 = smul.addr %s244, 4
      %s246 = scalar_lea.vmem %s0, %s245
      %p247 = scmp.lt.s32.totalorder %s17, 1
      %s248 = scalar_select %p247, %s17, 1
      %s249 = smul.addr %s248, 2
      %s250 = smul.addr %s249, 4
      %s251 = scalar_lea.vmem %s6, %s250
      %v253 = vld [vmem:[%s246] sm:$0xff]
      %v254 = vld [vmem:[%s5] ss:$2 sm:$0x3]
      %v255 = vlaneseq
      %v256 = vshrl.u32 %v255, 7
      %v257 = vsub.s32 0, %v256
      %v258 = vrot.slane %v254, %v257
      %v259 = vlaneseq
      %v260 = vshrl.u32 %v259, 7
      %v261 = vsub.s32 1, %v260
      %v262 = vrot.slane %v254, %v261
      %s263 = scalar_lea.vmem %s5, 1
      %v264 = vld [vmem:[%s263] ss:$2 sm:$0x3]
      %v265 = vlaneseq
      %v266 = vshrl.u32 %v265, 7
      %v267 = vsub.s32 0, %v266
      %v268 = vrot.slane %v264, %v267
      %v269 = vlaneseq
      %v270 = vshrl.u32 %v269, 7
      %v271 = vsub.s32 1, %v270
      %v272 = vrot.slane %v264, %v271
      %vm273 = vcmp.ge.s32.totalorder %v258, 1
      %vm274 = vcmp.ge.s32.totalorder %v262, 1
      %vm275 = vcmp.lt.s32.totalorder %v258, 15
      %vm276 = vcmp.lt.s32.totalorder %v262, 15
      %vm277 = vcmp.ge.s32.totalorder %v268, 1
      %vm278 = vcmp.ge.s32.totalorder %v272, 1
      %vm279 = vcmp.lt.s32.totalorder %v268, 15
      %vm280 = vcmp.lt.s32.totalorder %v272, 15
      %v282 = vcombine.high %v253, %v253
      %v284 = vpack.c.bf16 %v253, %v253
      %v285 = vpack.c.bf16 %v282, %v282
      %v288 = vunpack.c.l.b16 %v284
      %v289 = vunpack.c.l.b16 %v285
      %v290 = vpack.c.b16 %v289, %v288
      %292 = vst [vmem:[#allocation2 + $0x10] sm:$0x33] %v290
      %293 = vrot.lane.b32.xlu0 %v253, 17
      %v294 = vpop.permute.xlu0 %293
      %295 = vrot.lane.b32.xlu0 %v282, 17
      %v296 = vpop.permute.xlu0 %295
      %v297 = vlaneseq
      %v298 = vand.u32 %v297, 127
      %vm299 = vcmp.lt.s32.totalorder %v298, 17
      %v300 = vsel %vm299, %v294, %v296
      %v301 = vsel %vm299, %v296, %v294
      %v302 = vsel %vm273, %v301, 0.0
      %v303 = vsel %vm274, %v300, 0.0
      %v304 = vsel %vm277, %v302, 0.0
      %v305 = vsel %vm278, %v303, 0.0
      %v306 = vpack.c.bf16 %v304, %v304
      %v307 = vpack.c.bf16 %v305, %v305
      %v310 = vunpack.c.l.b16 %v306
      %v311 = vunpack.c.l.b16 %v307
      %v312 = vpack.c.b16 %v311, %v310
      %314 = vst [vmem:[#allocation2] sm:$0x33] %v312
      %315 = vrot.lane.b32.xlu0 %v253, 16
      %v316 = vpop.permute.xlu0 %315
      %317 = vrot.lane.b32.xlu0 %v282, 16
      %v318 = vpop.permute.xlu0 %317
      %vm319 = vcmp.lt.s32.totalorder %v298, 16
      %v320 = vsel %vm319, %v316, %v318
      %v321 = vsel %vm319, %v318, %v316
      %v322 = vsel %vm273, %v321, 0.0
      %v323 = vsel %vm274, %v320, 0.0
      %v324 = vpack.c.bf16 %v322, %v322
      %v325 = vpack.c.bf16 %v323, %v323
      %v328 = vunpack.c.l.b16 %v324
      %v329 = vunpack.c.l.b16 %v325
      %v330 = vpack.c.b16 %v329, %v328
      %v331 = vrot.slane %v330, 6
      %333 = vst [vmem:[#allocation2] sm:$0xcc] %v331
      %334 = vrot.lane.b32.xlu0 %v253, 15
      %v335 = vpop.permute.xlu0 %334
      %336 = vrot.lane.b32.xlu0 %v282, 15
      %v337 = vpop.permute.xlu0 %336
      %vm338 = vcmp.lt.s32.totalorder %v298, 15
      %v339 = vsel %vm338, %v335, %v337
      %v340 = vsel %vm338, %v337, %v335
      %v341 = vsel %vm273, %v340, 0.0
      %v342 = vsel %vm274, %v339, 0.0
      %v343 = vsel %vm279, %v341, 0.0
      %v344 = vsel %vm280, %v342, 0.0
      %v345 = vpack.c.bf16 %v343, %v343
      %v346 = vpack.c.bf16 %v344, %v344
      %v349 = vunpack.c.l.b16 %v345
      %v350 = vunpack.c.l.b16 %v346
      %v351 = vpack.c.b16 %v350, %v349
      %353 = vst [vmem:[#allocation2 + $0x8] sm:$0x33] %v351
      %354 = vrot.lane.b32.xlu0 %v253, 1
      %v355 = vpop.permute.xlu0 %354
      %356 = vrot.lane.b32.xlu0 %v282, 1
      %v357 = vpop.permute.xlu0 %356
      %vm358 = vcmp.lt.s32.totalorder %v298, 1
      %v359 = vsel %vm358, %v355, %v357
      %v360 = vsel %vm358, %v357, %v355
      %v361 = vsel %vm277, %v360, 0.0
      %v362 = vsel %vm278, %v359, 0.0
      %v363 = vpack.c.bf16 %v361, %v361
      %v364 = vpack.c.bf16 %v362, %v362
      %v367 = vunpack.c.l.b16 %v363
      %v368 = vunpack.c.l.b16 %v364
      %v369 = vpack.c.b16 %v368, %v367
      %v370 = vrot.slane %v369, 6
      %372 = vst [vmem:[#allocation2 + $0x8] sm:$0xcc] %v370
      %373 = vrot.lane.b32.xlu0 %v253, 127
      %v374 = vpop.permute.xlu0 %373
      %375 = vrot.lane.b32.xlu0 %v282, 127
      %v376 = vpop.permute.xlu0 %375
      %vm377 = vcmp.lt.s32.totalorder %v298, 127
      %v378 = vsel %vm377, %v374, %v376
      %v379 = vsel %vm377, %v376, %v374
      %v380 = vsel %vm279, %v378, 0.0
      %v381 = vsel %vm280, %v379, 0.0
      %v382 = vpack.c.bf16 %v380, %v380
      %v383 = vpack.c.bf16 %v381, %v381
      %v386 = vunpack.c.l.b16 %v382
      %v387 = vunpack.c.l.b16 %v383
      %v388 = vpack.c.b16 %v387, %v386
      %v389 = vrot.slane %v388, 6
      %391 = vst [vmem:[#allocation2 + $0x10] sm:$0xcc] %v389
      %392 = vrot.lane.b32.xlu0 %v253, 113
      %v393 = vpop.permute.xlu0 %392
      %394 = vrot.lane.b32.xlu0 %v282, 113
      %v395 = vpop.permute.xlu0 %394
      %vm396 = vcmp.lt.s32.totalorder %v298, 113
      %v397 = vsel %vm396, %v393, %v395
      %v398 = vsel %vm396, %v395, %v393
      %v399 = vsel %vm275, %v397, 0.0
      %v400 = vsel %vm276, %v398, 0.0
      %v401 = vsel %vm277, %v399, 0.0
      %v402 = vsel %vm278, %v400, 0.0
      %v403 = vpack.c.bf16 %v401, %v401
      %v404 = vpack.c.bf16 %v402, %v402
      %v407 = vunpack.c.l.b16 %v403
      %v408 = vunpack.c.l.b16 %v404
      %v409 = vpack.c.b16 %v408, %v407
      %411 = vst [vmem:[#allocation2 + $0x18] sm:$0x33] %v409
      %412 = vrot.lane.b32.xlu0 %v253, 112
      %v413 = vpop.permute.xlu0 %412
      %414 = vrot.lane.b32.xlu0 %v282, 112
      %v415 = vpop.permute.xlu0 %414
      %vm416 = vcmp.lt.s32.totalorder %v298, 112
      %v417 = vsel %vm416, %v413, %v415
      %v418 = vsel %vm416, %v415, %v413
      %v419 = vsel %vm275, %v417, 0.0
      %v420 = vsel %vm276, %v418, 0.0
      %v421 = vpack.c.bf16 %v419, %v419
      %v422 = vpack.c.bf16 %v420, %v420
      %v425 = vunpack.c.l.b16 %v421
      %v426 = vunpack.c.l.b16 %v422
      %v427 = vpack.c.b16 %v426, %v425
      %v428 = vrot.slane %v427, 6
      %430 = vst [vmem:[#allocation2 + $0x18] sm:$0xcc] %v428
      %431 = vrot.lane.b32.xlu0 %v253, 111
      %v432 = vpop.permute.xlu0 %431
      %433 = vrot.lane.b32.xlu0 %v282, 111
      %v434 = vpop.permute.xlu0 %433
      %vm435 = vcmp.lt.s32.totalorder %v298, 111
      %v436 = vsel %vm435, %v432, %v434
      %v437 = vsel %vm435, %v434, %v432
      %v438 = vsel %vm275, %v436, 0.0
      %v439 = vsel %vm276, %v437, 0.0
      %v440 = vsel %vm279, %v438, 0.0
      %v441 = vsel %vm280, %v439, 0.0
      %v442 = vpack.c.bf16 %v440, %v440
      %v443 = vpack.c.bf16 %v441, %v441
      %v446 = vunpack.c.l.b16 %v442
      %v447 = vunpack.c.l.b16 %v443
      %v448 = vpack.c.b16 %v447, %v446
      %450 = vst [vmem:[#allocation2 + $0x20] sm:$0x33] %v448
      %v451 = vld [vmem:[%s1] sm:$0x3]
      %v452 = vld [vmem:[#allocation2] sm:$0xff]
      %v453 = vld [vmem:[#allocation2 + $0x8] sm:$0xff]
      %v454 = vld [vmem:[#allocation2 + $0x10] sm:$0xff]
      %v455 = vld [vmem:[#allocation2 + $0x18] sm:$0xff]
      %v456 = vld [vmem:[#allocation2 + $0x20] sm:$0x33]
      %v457 = vld [vmem:[%s3] sm:$0xf]
      %459 = vset.pattern.permute.xlu0 0
      %460 = vperm.xlu0 %459, %v457
      %v461 = vpop.permute.xlu0 %460
      %v468 = vunpack.c.l.b16 %v452
      %v469 = vunpack.c.h.b16 %v452
      %v470 = vunpack.c.l.b16 %v453
      %v471 = vunpack.c.h.b16 %v453
      %v472 = vunpack.c.l.b16 %v454
      %v473 = vunpack.c.h.b16 %v454
      %v474 = vunpack.c.l.b16 %v455
      %v475 = vunpack.c.h.b16 %v455
      %v476 = vunpack.c.l.b16 %v456
      %v477 = vunpack.c.h.b16 %v456
      %v478 = vpack.c.b16 %v470, %v468
      %v479 = vpack.c.b16 %v471, %v469
      %v480 = vpack.c.b16 %v474, %v472
      %v481 = vpack.c.b16 %v475, %v473
      %v482 = vpack.c.b16 %v476, %v476
      %v483 = vpack.c.b16 %v477, %v477
      %vm488 = vcmask 293888
      %v490 = vsel %vm488, %v451, 0
      %vm492 = vcmask 1041408
      %v494 = vsel %vm492, %v482, 0
      %v497 = vsel %vm492, %v483, 0
      %499 = vmatprep.subr.bf16.mxu0 %v479
      %500 = vmatpush1.bf16.msra.mxu0 %v478
      %501 = vmatprep.subr.bf16.mxu0 %v481
      %502 = vmatpush1.bf16.msra.mxu0 %v480
      %503 = vmatprep.subr.bf16.mxu0 %v497
      %504 = vmatpush1.bf16.msra.mxu0 %v494
      %505 = vmatprep.subr.bf16.mxu0 0
      %506 = vmatpush1.bf16.msra.mxu0 0
      %507 = vmatprep.subr.bf16.mxu0 0
      %508 = vmatpush1.bf16.msra.mxu0 0
      %509 = vmatprep.subr.bf16.mxu0 0
      %510 = vmatpush1.bf16.msra.mxu0 0
      %511 = vmatprep.subr.bf16.mxu0 0
      %512 = vmatpush1.bf16.msra.mxu0 0
      %513 = vmatprep.subr.bf16.mxu0 0
      %514 = vmatpush1.bf16.msra.mxu0 0
      %515 = vmatprep.subr.bf16.mxu0 0
      %516 = vmatpush1.bf16.msra.mxu0 0
      %517 = vmatprep.subr.bf16.mxu0 0
      %518 = vmatpush1.bf16.msra.mxu0 0
      %519 = vmatprep.subr.bf16.mxu0 0
      %520 = vmatpush1.bf16.msra.mxu0 0
      %521 = vmatprep.subr.bf16.mxu0 0
      %522 = vmatpush1.bf16.msra.mxu0 0
      %523 = vmatprep.subr.bf16.mxu0 0
      %524 = vmatpush1.bf16.msra.mxu0 0
      %525 = vmatprep.subr.bf16.mxu0 0
      %526 = vmatpush1.bf16.msra.mxu0 0
      %527 = vmatprep.subr.bf16.mxu0 0
      %528 = vmatpush1.bf16.msra.mxu0 0
      %529 = vmatprep.subr.bf16.mxu0 0
      %530 = vmatpush1.bf16.msra.mxu0 0
      %531 = vmatprep.mubr.bf16.mxu0 0
      %532 = vmatmul.mubr.bf16.gmra.mrb[0].mxu0 %v490
      %v533 = vpop.f32.mrb[0].mxu0
      %v534 = vadd.f32 %v461, %v533
      %v535 = vpop.f32.mrb[0].mxu0
      %v536 = vadd.f32 %v461, %v535
      %v537 = vpop.f32.mrb[0].mxu0
      %v538 = vpop.f32.mrb[0].mxu0
      %539 = vdwg.mxu0
      %v540 = vmax.f32 %v534, 0.0
      %v541 = vmax.f32 %v536, 0.0
      %v542 = vld [vmem:[%s5] ss:$2 sm:$0x3]
      %v543 = vlaneseq
      %v544 = vshrl.u32 %v543, 7
      %v545 = vsub.s32 0, %v544
      %v546 = vrot.slane %v542, %v545
      %v547 = vlaneseq
      %v548 = vshrl.u32 %v547, 7
      %v549 = vsub.s32 1, %v548
      %v550 = vrot.slane %v542, %v549
      %v551 = vld [vmem:[%s263] ss:$2 sm:$0x3]
      %v552 = vlaneseq
      %v553 = vshrl.u32 %v552, 7
      %v554 = vsub.s32 0, %v553
      %v555 = vrot.slane %v551, %v554
      %v556 = vlaneseq
      %v557 = vshrl.u32 %v556, 7
      %v558 = vsub.s32 1, %v557
      %v559 = vrot.slane %v551, %v558
      %vm560 = vcmp.ge.s32.totalorder %v546, 1
      %vm561 = vcmp.ge.s32.totalorder %v550, 1
      %vm562 = vcmp.lt.s32.totalorder %v546, 15
      %vm563 = vcmp.lt.s32.totalorder %v550, 15
      %vm564 = vcmp.ge.s32.totalorder %v555, 1
      %vm565 = vcmp.ge.s32.totalorder %v559, 1
      %vm566 = vcmp.lt.s32.totalorder %v555, 15
      %vm567 = vcmp.lt.s32.totalorder %v559, 15
      %v568 = vpack.c.bf16 %v540, %v540
      %v569 = vpack.c.bf16 %v541, %v541
      %v572 = vunpack.c.l.b16 %v568
      %v573 = vunpack.c.l.b16 %v569
      %v574 = vpack.c.b16 %v573, %v572
      %576 = vst [vmem:[#allocation2 + $0x10] sm:$0x33] %v574
      %577 = vrot.lane.b32.xlu0 %v540, 17
      %v578 = vpop.permute.xlu0 %577
      %579 = vrot.lane.b32.xlu0 %v541, 17
      %v580 = vpop.permute.xlu0 %579
      %v581 = vsel %vm299, %v578, %v580
      %v582 = vsel %vm299, %v580, %v578
      %v583 = vsel %vm560, %v582, 0.0
      %v584 = vsel %vm561, %v581, 0.0
      %v585 = vsel %vm564, %v583, 0.0
      %v586 = vsel %vm565, %v584, 0.0
      %v587 = vpack.c.bf16 %v585, %v585
      %v588 = vpack.c.bf16 %v586, %v586
      %v591 = vunpack.c.l.b16 %v587
      %v592 = vunpack.c.l.b16 %v588
      %v593 = vpack.c.b16 %v592, %v591
      %595 = vst [vmem:[#allocation2] sm:$0x33] %v593
      %596 = vrot.lane.b32.xlu0 %v540, 16
      %v597 = vpop.permute.xlu0 %596
      %598 = vrot.lane.b32.xlu0 %v541, 16
      %v599 = vpop.permute.xlu0 %598
      %v600 = vsel %vm319, %v597, %v599
      %v601 = vsel %vm319, %v599, %v597
      %v602 = vsel %vm560, %v601, 0.0
      %v603 = vsel %vm561, %v600, 0.0
      %v604 = vpack.c.bf16 %v602, %v602
      %v605 = vpack.c.bf16 %v603, %v603
      %v608 = vunpack.c.l.b16 %v604
      %v609 = vunpack.c.l.b16 %v605
      %v610 = vpack.c.b16 %v609, %v608
      %v611 = vrot.slane %v610, 6
      %613 = vst [vmem:[#allocation2] sm:$0xcc] %v611
      %614 = vrot.lane.b32.xlu0 %v540, 15
      %v615 = vpop.permute.xlu0 %614
      %616 = vrot.lane.b32.xlu0 %v541, 15
      %v617 = vpop.permute.xlu0 %616
      %v618 = vsel %vm338, %v615, %v617
      %v619 = vsel %vm338, %v617, %v615
      %v620 = vsel %vm560, %v619, 0.0
      %v621 = vsel %vm561, %v618, 0.0
      %v622 = vsel %vm566, %v620, 0.0
      %v623 = vsel %vm567, %v621, 0.0
      %v624 = vpack.c.bf16 %v622, %v622
      %v625 = vpack.c.bf16 %v623, %v623
      %v628 = vunpack.c.l.b16 %v624
      %v629 = vunpack.c.l.b16 %v625
      %v630 = vpack.c.b16 %v629, %v628
      %632 = vst [vmem:[#allocation2 + $0x8] sm:$0x33] %v630
      %633 = vrot.lane.b32.xlu0 %v540, 1
      %v634 = vpop.permute.xlu0 %633
      %635 = vrot.lane.b32.xlu0 %v541, 1
      %v636 = vpop.permute.xlu0 %635
      %v637 = vsel %vm358, %v634, %v636
      %v638 = vsel %vm358, %v636, %v634
      %v639 = vsel %vm564, %v638, 0.0
      %v640 = vsel %vm565, %v637, 0.0
      %v641 = vpack.c.bf16 %v639, %v639
      %v642 = vpack.c.bf16 %v640, %v640
      %v645 = vunpack.c.l.b16 %v641
      %v646 = vunpack.c.l.b16 %v642
      %v647 = vpack.c.b16 %v646, %v645
      %v648 = vrot.slane %v647, 6
      %650 = vst [vmem:[#allocation2 + $0x8] sm:$0xcc] %v648
      %651 = vrot.lane.b32.xlu0 %v540, 127
      %v652 = vpop.permute.xlu0 %651
      %653 = vrot.lane.b32.xlu0 %v541, 127
      %v654 = vpop.permute.xlu0 %653
      %v655 = vsel %vm377, %v652, %v654
      %v656 = vsel %vm377, %v654, %v652
      %v657 = vsel %vm566, %v655, 0.0
      %v658 = vsel %vm567, %v656, 0.0
      %v659 = vpack.c.bf16 %v657, %v657
      %v660 = vpack.c.bf16 %v658, %v658
      %v663 = vunpack.c.l.b16 %v659
      %v664 = vunpack.c.l.b16 %v660
      %v665 = vpack.c.b16 %v664, %v663
      %v666 = vrot.slane %v665, 6
      %668 = vst [vmem:[#allocation2 + $0x10] sm:$0xcc] %v666
      %669 = vrot.lane.b32.xlu0 %v540, 113
      %v670 = vpop.permute.xlu0 %669
      %671 = vrot.lane.b32.xlu0 %v541, 113
      %v672 = vpop.permute.xlu0 %671
      %v673 = vsel %vm396, %v670, %v672
      %v674 = vsel %vm396, %v672, %v670
      %v675 = vsel %vm562, %v673, 0.0
      %v676 = vsel %vm563, %v674, 0.0
      %v677 = vsel %vm564, %v675, 0.0
      %v678 = vsel %vm565, %v676, 0.0
      %v679 = vpack.c.bf16 %v677, %v677
      %v680 = vpack.c.bf16 %v678, %v678
      %v683 = vunpack.c.l.b16 %v679
      %v684 = vunpack.c.l.b16 %v680
      %v685 = vpack.c.b16 %v684, %v683
      %687 = vst [vmem:[#allocation2 + $0x18] sm:$0x33] %v685
      %688 = vrot.lane.b32.xlu0 %v540, 112
      %v689 = vpop.permute.xlu0 %688
      %690 = vrot.lane.b32.xlu0 %v541, 112
      %v691 = vpop.permute.xlu0 %690
      %v692 = vsel %vm416, %v689, %v691
      %v693 = vsel %vm416, %v691, %v689
      %v694 = vsel %vm562, %v692, 0.0
      %v695 = vsel %vm563, %v693, 0.0
      %v696 = vpack.c.bf16 %v694, %v694
      %v697 = vpack.c.bf16 %v695, %v695
      %v700 = vunpack.c.l.b16 %v696
      %v701 = vunpack.c.l.b16 %v697
      %v702 = vpack.c.b16 %v701, %v700
      %v703 = vrot.slane %v702, 6
      %705 = vst [vmem:[#allocation2 + $0x18] sm:$0xcc] %v703
      %706 = vrot.lane.b32.xlu0 %v540, 111
      %v707 = vpop.permute.xlu0 %706
      %708 = vrot.lane.b32.xlu0 %v541, 111
      %v709 = vpop.permute.xlu0 %708
      %v710 = vsel %vm435, %v707, %v709
      %v711 = vsel %vm435, %v709, %v707
      %v712 = vsel %vm562, %v710, 0.0
      %v713 = vsel %vm563, %v711, 0.0
      %v714 = vsel %vm566, %v712, 0.0
      %v715 = vsel %vm567, %v713, 0.0
      %v716 = vpack.c.bf16 %v714, %v714
      %v717 = vpack.c.bf16 %v715, %v715
      %v720 = vunpack.c.l.b16 %v716
      %v721 = vunpack.c.l.b16 %v717
      %v722 = vpack.c.b16 %v721, %v720
      %724 = vst [vmem:[#allocation2 + $0x20] sm:$0x33] %v722
      %v725 = vld [vmem:[%s2] sm:$0x3]
      %v726 = vld [vmem:[#allocation2] sm:$0xff]
      %v727 = vld [vmem:[#allocation2 + $0x8] sm:$0xff]
      %v728 = vld [vmem:[#allocation2 + $0x10] sm:$0xff]
      %v729 = vld [vmem:[#allocation2 + $0x18] sm:$0xff]
      %v730 = vld [vmem:[#allocation2 + $0x20] sm:$0x33]
      %v731 = vld [vmem:[%s4] sm:$0xf]
      %733 = vset.pattern.permute.xlu0 0
      %734 = vperm.xlu0 %733, %v731
      %v735 = vpop.permute.xlu0 %734
      %v742 = vunpack.c.l.b16 %v726
      %v743 = vunpack.c.h.b16 %v726
      %v744 = vunpack.c.l.b16 %v727
      %v745 = vunpack.c.h.b16 %v727
      %v746 = vunpack.c.l.b16 %v728
      %v747 = vunpack.c.h.b16 %v728
      %v748 = vunpack.c.l.b16 %v729
      %v749 = vunpack.c.h.b16 %v729
      %v750 = vunpack.c.l.b16 %v730
      %v751 = vunpack.c.h.b16 %v730
      %v752 = vpack.c.b16 %v744, %v742
      %v753 = vpack.c.b16 %v745, %v743
      %v754 = vpack.c.b16 %v748, %v746
      %v755 = vpack.c.b16 %v749, %v747
      %v756 = vpack.c.b16 %v750, %v750
      %v757 = vpack.c.b16 %v751, %v751
      %v763 = vsel %vm488, %v725, 0
      %v766 = vsel %vm492, %v756, 0
      %v769 = vsel %vm492, %v757, 0
      %771 = vmatprep.subr.bf16.mxu0 %v753
      %772 = vmatpush1.bf16.msra.mxu0 %v752
      %773 = vmatprep.subr.bf16.mxu0 %v755
      %774 = vmatpush1.bf16.msra.mxu0 %v754
      %775 = vmatprep.subr.bf16.mxu0 %v769
      %776 = vmatpush1.bf16.msra.mxu0 %v766
      %777 = vmatprep.subr.bf16.mxu0 0
      %778 = vmatpush1.bf16.msra.mxu0 0
      %779 = vmatprep.subr.bf16.mxu0 0
      %780 = vmatpush1.bf16.msra.mxu0 0
      %781 = vmatprep.subr.bf16.mxu0 0
      %782 = vmatpush1.bf16.msra.mxu0 0
      %783 = vmatprep.subr.bf16.mxu0 0
      %784 = vmatpush1.bf16.msra.mxu0 0
      %785 = vmatprep.subr.bf16.mxu0 0
      %786 = vmatpush1.bf16.msra.mxu0 0
      %787 = vmatprep.subr.bf16.mxu0 0
      %788 = vmatpush1.bf16.msra.mxu0 0
      %789 = vmatprep.subr.bf16.mxu0 0
      %790 = vmatpush1.bf16.msra.mxu0 0
      %791 = vmatprep.subr.bf16.mxu0 0
      %792 = vmatpush1.bf16.msra.mxu0 0
      %793 = vmatprep.subr.bf16.mxu0 0
      %794 = vmatpush1.bf16.msra.mxu0 0
      %795 = vmatprep.subr.bf16.mxu0 0
      %796 = vmatpush1.bf16.msra.mxu0 0
      %797 = vmatprep.subr.bf16.mxu0 0
      %798 = vmatpush1.bf16.msra.mxu0 0
      %799 = vmatprep.subr.bf16.mxu0 0
      %800 = vmatpush1.bf16.msra.mxu0 0
      %801 = vmatprep.subr.bf16.mxu0 0
      %802 = vmatpush1.bf16.msra.mxu0 0
      %803 = vmatprep.mubr.bf16.mxu0 0
      %804 = vmatmul.mubr.bf16.gmra.mrb[0].mxu0 %v763
      %v805 = vpop.f32.mrb[0].mxu0
      %v806 = vadd.f32 %v735, %v805
      %v807 = vpop.f32.mrb[0].mxu0
      %v808 = vadd.f32 %v735, %v807
      %v809 = vpop.f32.mrb[0].mxu0
      %v810 = vpop.f32.mrb[0].mxu0
      %811 = vdwg.mxu0
      %v812 = vld [vmem:[%s246] sm:$0xff]
      %v814 = vcombine.high %v812, %v812
      %v816 = vadd.f32 %v806, %v812
      %v817 = vadd.f32 %v808, %v814
      %v818 = vmax.f32 %v816, 0.0
      %v819 = vmax.f32 %v817, 0.0
      %v822 = vcombine.low %v818, %v819
      %824 = vst [vmem:[%s251] sm:$0xff] %v822
      %p825 = scmp.lt.s32.totalorder %s17, 1
      %s826 = scalar_select %p825, %s17, 1
      %s827 = smul.addr %s826, 2
      %s828 = smul.addr %s827, 4
      %s829 = scalar_lea.vmem %s6, %s828
      // Predicated region
      $region45: #{basic_block_enc.1} parent=43 // pred_check
        %p830 = pneg %p166
      $region46: #{basic_block_enc.1} parent=43 // pred_check_branch
        %832 = sbr.rel (%p830) target = $region48
      $region47: #{basic_block_enc.1} parent=43 // pred_region
        _
      $region48: #{basic_block_enc.1} parent=43 // pred_fallthru
        _
    $region44: #{basic_block_enc.1} parent=5 // pred_fallthru
      _
    %p833 = scmp.le.s32.totalorder 2, %s12
    // Predicated region
    $region49: #{basic_block_enc.1} parent=5 // pred_check
      %p834 = pneg %p833
    $region50: #{basic_block_enc.1} parent=5 // pred_check_branch
      %836 = sbr.rel (%p834) target = $region52
    $region51: #{basic_block_enc.1} parent=5 // pred_region
      %s837 = ssub.s32 %s12, 2
      // Predicated region
      $region53: #{basic_block_enc.1} parent=51 // pred_check
        %p838 = pneg %p172
      $region54: #{basic_block_enc.1} parent=51 // pred_check_branch
        %840 = sbr.rel (%p838) target = $region56
      $region55: #{basic_block_enc.1} parent=51 // pred_region
        %p841 = scmp.lt.s32.totalorder %s18, 1
        %s842 = scalar_select %p841, %s18, 1
        %s843 = smul.addr %s842, 2
        %s844 = smul.addr %s843, 4
        %s845 = scalar_lea.vmem %s6, %s844
      $region56: #{basic_block_enc.1} parent=51 // pred_fallthru
        _
    $region52: #{basic_block_enc.1} parent=5 // pred_fallthru
      _
  $region6: #{basic_block_enc.1} parent=0 // loop_footer
    %s16 = sadd.s32 1, %s12
  $region7: #{basic_block_enc.1} parent=0 // loop_footer_branch
    %11 = sbr.rel target = $region3
  $region8: #{basic_block_enc.1} parent=0 // loop_exit
    _

</llo_original>
